<compile_context>
chip_gen: v6e
topology: v6e:2x2x1
jax: 0.10.0
libtpu: 0.0.40
codegen_flags: <defaults>
</compile_context>

<pallas_src>
import functools

import jax
import jax.numpy as jnp
from jax.experimental import pallas as pl
from jax.experimental.pallas import tpu as pltpu


def _round_up(n, m):
    return ((n + m - 1) // m) * m


def _center_loss_kernel(x_ref, lbl_ref, c_ref, out_ref, *, batch, block_rows):
    # x_ref   : VMEM (TB, D)   feature rows of this batch tile
    # lbl_ref : VMEM (TB, 1)   int32 labels of this batch tile
    # c_ref   : VMEM (C, D)    full centers table (resident across the grid)
    # out_ref : VMEM (8, 128)  this tile's partial sum, broadcast-filled
    tile = pl.program_id(0)

    x = x_ref[...].astype(jnp.float32)                          # (TB, D)
    lbl = lbl_ref[...]                                          # (TB, 1)
    centers = c_ref[...]                                        # (C, D)

    tb = x.shape[0]
    num_classes = centers.shape[0]

    # One-hot gather of centers[labels] on the MXU (free unit here).
    classes = jax.lax.broadcasted_iota(jnp.int32, (tb, num_classes), 1)
    onehot = (lbl == classes).astype(centers.dtype)             # (TB, C)
    gathered = jnp.dot(onehot, centers,
                       preferred_element_type=jnp.float32)      # (TB, D)

    diff = x - gathered
    d = jnp.sum(diff * diff, axis=-1, keepdims=True)            # (TB, 1)
    d = jnp.clip(d, 1e-12, 1e12)

    # Zero out contributions from padded rows (batch padded up to TB multiple).
    row = jax.lax.broadcasted_iota(jnp.int32, (tb, 1), 0) + tile * block_rows
    valid = (row < batch).astype(jnp.float32)

    partial = jnp.sum(d * valid)                                # scalar per tile
    out_ref[...] = jnp.full((8, 128), partial, dtype=jnp.float32)


def center_loss(x, centers, labels, *, block_rows=512):
    """x: (B, D) float, centers: (C, D) float, labels: (B,) int -> scalar loss."""
    B, D = x.shape
    C, Dc = centers.shape
    assert D == Dc

    TB = _round_up(min(block_rows, _round_up(B, 8)), 8)
    B_pad = _round_up(B, TB)
    num_tiles = B_pad // TB

    labels_i32 = labels.reshape(B).astype(jnp.int32)
    x_p = x
    if B_pad != B:
        x_p = jnp.pad(x, ((0, B_pad - B), (0, 0)))
        labels_i32 = jnp.pad(labels_i32, (0, B_pad - B))
    labels_2d = labels_i32.reshape(B_pad, 1)

    kernel = functools.partial(_center_loss_kernel, batch=B, block_rows=TB)

    cost = pl.CostEstimate(
        flops=2 * B_pad * C * D + 3 * B_pad * D,
        transcendentals=0,
        bytes_accessed=(x_p.nbytes + centers.nbytes + labels_2d.nbytes
                        + num_tiles * 8 * 128 * 4),
    )

    # VMEM budget: double-buffered x/label tiles + resident centers + out slab.
    x_item = jnp.dtype(x.dtype).itemsize
    c_item = jnp.dtype(centers.dtype).itemsize
    vmem_need = (2 * TB * D * x_item + 2 * TB * 4
                 + 2 * C * D * c_item + 2 * 8 * 128 * 4)
    compiler_kwargs = dict(dimension_semantics=("parallel",))
    if vmem_need > 32 * 1024 * 1024:
        # Stay comfortably under v7x's 64 MiB physical VMEM.
        compiler_kwargs["vmem_limit_bytes"] = min(int(vmem_need * 1.25),
                                                  56 * 1024 * 1024)

    out = pl.pallas_call(
        kernel,
        out_shape=jax.ShapeDtypeStruct((num_tiles * 8, 128), jnp.float32),
        grid_spec=pltpu.PrefetchScalarGridSpec(
            num_scalar_prefetch=0,
            grid=(num_tiles,),
            in_specs=[
                pl.BlockSpec((TB, D), lambda i: (i, 0)),   # x batch tile
                pl.BlockSpec((TB, 1), lambda i: (i, 0)),   # labels batch tile
                pl.BlockSpec((C, D), lambda i: (0, 0)),    # centers, resident
            ],
            out_specs=pl.BlockSpec((8, 128), lambda i: (i, 0)),
        ),
        compiler_params=pltpu.CompilerParams(**compiler_kwargs),
        cost_estimate=cost,
    )(x_p, labels_2d, centers)

    partials = out[::8, 0]                                   # one value per tile
    # PyTorch clamps AFTER masking: B*(C-1) masked-out entries add 1e-12 each.
    slack = jnp.float32(B * (C - 1) * 1e-12)
    return (jnp.sum(partials) + slack) / jnp.float32(B)


def center_loss_ref(x, centers, labels):
    """Pure-JAX reference mirroring the PyTorch forward exactly."""
    B = x.shape[0]
    C = centers.shape[0]
    distmat = (
        jnp.sum(x**2, axis=1, keepdims=True)
        + jnp.sum(centers**2, axis=1, keepdims=True).T
        - 2.0 * x @ centers.T
    )
    mask = (labels[:, None] == jnp.arange(C)[None, :]).astype(jnp.float32)
    dist = jnp.clip(distmat * mask, 1e-12, 1e12)
    return jnp.sum(dist) / B


if __name__ == "__main__":
    num_classes = 2
    feat_dim = 128
    batch = 20

    key = jax.random.PRNGKey(0)
    k_centers, k_x, k_labels = jax.random.split(key, 3)

    # Deterministic "parameter" init (torch.randn equivalent shapes).
    centers = jax.random.normal(k_centers, (num_classes, feat_dim), dtype=jnp.float32)
    x = jax.random.normal(k_x, (batch, feat_dim), dtype=jnp.float32)
    labels = jax.random.randint(k_labels, (batch,), 0, num_classes, dtype=jnp.int32)

    ref = center_loss_ref(x, centers, labels)

    # Default path: one tile covers the whole (padded) batch.
    loss = center_loss(x, centers, labels)
    jax.block_until_ready(loss)
    assert jnp.allclose(loss, ref, rtol=1e-5, atol=1e-4), (loss, ref)

    # Multi-tile path: exercises the "parallel" grid axis and batch padding.
    loss_tiled = center_loss(x, centers, labels, block_rows=8)
    jax.block_until_ready(loss_tiled)
    assert jnp.allclose(loss_tiled, ref, rtol=1e-5, atol=1e-4), (loss_tiled, ref)

    print("KERNEL_OK")
</pallas_src>

<mosaic_0001>
module attributes {stable_mosaic.version = 11 : i64} {
  func.func @_center_loss_kernel(%arg0: i32, %arg1: memref<24x128xf32, #tpu.memory_space<vmem>>, %arg2: memref<24x1xi32, #tpu.memory_space<vmem>>, %arg3: memref<2x128xf32, #tpu.memory_space<vmem>>, %arg4: memref<8x128xf32, #tpu.memory_space<vmem>>) attributes {dimension_semantics = [#tpu.dimension_semantics<parallel>], iteration_bounds = array<i64: 1>, scalar_prefetch = 0 : i64, scratch_operands = 0 : i64, tpu.core_type = #tpu.core_type<tc>, window_params = [{transform_indices = @transform_0, window_bounds = array<i64: 24, 128>}, {transform_indices = @transform_1, window_bounds = array<i64: 24, 1>}, {pipeline_mode = #tpu.pipeline_mode<synchronous>, transform_indices = @transform_2, window_bounds = array<i64: 2, 128>}, {transform_indices = @transform_3, window_bounds = array<i64: 8, 128>}]} {
    %c0 = arith.constant 0 : index
    %c0_0 = arith.constant 0 : index
    %0 = vector.load %arg1[%c0, %c0_0] : memref<24x128xf32, #tpu.memory_space<vmem>>, vector<24x128xf32>
    %c0_1 = arith.constant 0 : index
    %c0_2 = arith.constant 0 : index
    %1 = vector.load %arg2[%c0_1, %c0_2] : memref<24x1xi32, #tpu.memory_space<vmem>>, vector<24x1xi32>
    %c0_3 = arith.constant 0 : index
    %c0_4 = arith.constant 0 : index
    %2 = vector.load %arg3[%c0_3, %c0_4] : memref<2x128xf32, #tpu.memory_space<vmem>>, vector<2x128xf32>
    %3 = tpu.iota {dimensions = array<i32: 1>} : vector<24x2xi32>
    %4 = vector.broadcast %1 : vector<24x1xi32> to vector<24x2xi32>
    %5 = arith.cmpi eq, %4, %3 : vector<24x2xi32>
    %6 = arith.extui %5 : vector<24x2xi1> to vector<24x2xi32>
    %7 = arith.sitofp %6 : vector<24x2xi32> to vector<24x2xf32>
    %cst = arith.constant dense<0.000000e+00> : vector<24x128xf32>
    %8 = tpu.matmul %7, %2, %cst {dimension_numbers = #tpu.dot_dimension_numbers<[1], [0], [0], [1], [0, 0, 1, 1], [], []>} : vector<24x2xf32>, vector<2x128xf32>, vector<24x128xf32> -> vector<24x128xf32>
    %9 = arith.subf %0, %8 : vector<24x128xf32>
    %10 = arith.mulf %9, %9 : vector<24x128xf32>
    %cst_5 = arith.constant dense<0.000000e+00> : vector<24xf32>
    %11 = vector.multi_reduction <add>, %10, %cst_5 [1] : vector<24x128xf32> to vector<24xf32>
    %12 = vector.shape_cast %11 : vector<24xf32> to vector<24x1xf32>
    %cst_6 = arith.constant 9.99999996E-13 : f32
    %cst_7 = arith.constant 9.99999995E+11 : f32
    %13 = vector.broadcast %cst_6 : f32 to vector<24x1xf32>
    %14 = arith.maximumf %13, %12 : vector<24x1xf32>
    %15 = vector.broadcast %cst_7 : f32 to vector<24x1xf32>
    %16 = arith.minimumf %15, %14 : vector<24x1xf32>
    %17 = tpu.iota {dimensions = array<i32: 0>} : vector<24x1xi32>
    %c24_i32 = arith.constant 24 : i32
    %18 = arith.muli %arg0, %c24_i32 : i32
    %19 = vector.broadcast %18 : i32 to vector<24x1xi32>
    %20 = arith.addi %17, %19 : vector<24x1xi32>
    %c20_i32 = arith.constant 20 : i32
    %21 = vector.broadcast %c20_i32 : i32 to vector<24x1xi32>
    %22 = arith.cmpi slt, %20, %21 : vector<24x1xi32>
    %23 = arith.extui %22 : vector<24x1xi1> to vector<24x1xi32>
    %24 = arith.sitofp %23 : vector<24x1xi32> to vector<24x1xf32>
    %25 = arith.mulf %16, %24 : vector<24x1xf32>
    %26 = vector.shape_cast %25 : vector<24x1xf32> to vector<1x24x1xf32>
    %cst_8 = arith.constant dense<0.000000e+00> : vector<1xf32>
    %27 = vector.multi_reduction <add>, %26, %cst_8 [1, 2] : vector<1x24x1xf32> to vector<1xf32>
    %28 = vector.shape_cast %27 : vector<1xf32> to vector<1x1x1xf32>
    %29 = vector.extract %28[0, 0, 0] : f32 from vector<1x1x1xf32>
    %30 = vector.broadcast %29 : f32 to vector<8x128xf32>
    %c0_9 = arith.constant 0 : index
    %c0_10 = arith.constant 0 : index
    %31 = vector.load %arg4[%c0_9, %c0_10] : memref<8x128xf32, #tpu.memory_space<vmem>>, vector<8x128xf32>
    tpu.vector_store %arg4[%c0_9, %c0_10], %30 {strides = array<i32>} : memref<8x128xf32, #tpu.memory_space<vmem>>, vector<8x128xf32>,
    return
  }
  func.func @transform_0(%arg0: i32) -> (i32, i32) {
    %c0_i32 = arith.constant 0 : i32
    %c0_i32_0 = arith.constant 0 : i32
    return %arg0, %c0_i32 : i32, i32
  }
  func.func @transform_1(%arg0: i32) -> (i32, i32) {
    %c0_i32 = arith.constant 0 : i32
    %c0_i32_0 = arith.constant 0 : i32
    return %arg0, %c0_i32 : i32, i32
  }
  func.func @transform_2(%arg0: i32) -> (i32, i32) {
    %c0_i32 = arith.constant 0 : i32
    %c0_i32_0 = arith.constant 0 : i32
    %c0_i32_1 = arith.constant 0 : i32
    return %c0_i32, %c0_i32_0 : i32, i32
  }
  func.func @transform_3(%arg0: i32) -> (i32, i32) {
    %c0_i32 = arith.constant 0 : i32
    %c0_i32_0 = arith.constant 0 : i32
    return %arg0, %c0_i32 : i32, i32
  }
}

</mosaic_0001>

<llo_original>
// kernel: tpu_custom_call.1
$region0: #{tpu_custom_call.1}
  #allocation0 [shape = 'u32[]', space=smem, size = 0x4, offset = 0x4, fixed_abs, tag = 'smem constant byte address 0x4 - core index']
  #allocation1 [shape = 'u32[144,128]{1,0:T(1,128)}', space=vmem, size = 0x12000, scoped, tag = 'internal scratch']
  %s0 = inlined_call_operand.vmem [shape: f32[24,128], index: 0, kind: input, shape index: {}]
  %s1 = inlined_call_operand.vmem [shape: s32[24,1], index: 1, kind: input, shape index: {}]
  %s2 = inlined_call_operand.vmem [shape: f32[2,128], index: 2, kind: input, shape index: {}]
  %s3 = inlined_call_operand.hbm [shape: f32[8,128], index: 3, kind: output, shape index: {}]
  %s4 = sld [smem:[#allocation0]]
  $region22: #{tpu_custom_call.1} parent=0
    _
  %s6 = ssub.s32 1, %s4
  %s7 = scalar_select 0, %s6, %s4
  $region1: #{tpu_custom_call.1} parent=0
    #allocation2 [shape = 'u8[4096]{0}', space=vmem, size = 0x1000, scoped, tag = 'output window, operand 0, single buffered']
    #allocation3 [shape = 's32[1]{0}', space=sflag, size = 0x4, scoped, tag = 'scoped memory for tpu_custom_call.1']
    %8 = vsyncpa [#allocation3], 0
    // Predicated region
    $region2: #{tpu_custom_call.1} parent=1 // pred_check
      _
    $region3: #{tpu_custom_call.1} parent=1 // pred_check_branch
      %10 = sbr.rel (0) target = $region5
    $region4: #{tpu_custom_call.1} parent=1 // pred_region
      _
    $region5: #{tpu_custom_call.1} parent=1 // pred_fallthru
      _
    // Predicated region
    $region6: #{tpu_custom_call.1} parent=1 // pred_check
      _
    $region7: #{tpu_custom_call.1} parent=1 // pred_check_branch
      %12 = sbr.rel (0) target = $region9
    $region8: #{tpu_custom_call.1} parent=1 // pred_region
      _
    $region9: #{tpu_custom_call.1} parent=1 // pred_fallthru
      _
    // Predicated region
    $region10: #{tpu_custom_call.1} parent=1 // pred_check
      _
    $region11: #{tpu_custom_call.1} parent=1 // pred_check_branch
      %14 = sbr.rel (0) target = $region13
    $region12: #{tpu_custom_call.1} parent=1 // pred_region
      _
    $region13: #{tpu_custom_call.1} parent=1 // pred_fallthru
      _
    %v15 = vld [vmem:[%s0] sm:$0xff]
    %v16 = vld [vmem:[%s0 + $0x8] sm:$0xff]
    %v17 = vld [vmem:[%s0 + $0x10] sm:$0xff]
    %v18 = vld [vmem:[%s1] sm:$0xff]
    %v19 = vld [vmem:[%s1 + $0x8] sm:$0xff]
    %v20 = vld [vmem:[%s1 + $0x10] sm:$0xff]
    %v21 = vld [vmem:[%s2] sm:$0x3]
    %v22 = vlaneseq
    %v23 = vand.u32 %v22, 127
    %24 = vset.pattern.permute.xlu0 0
    %25 = vperm.xlu0 %24, %v18
    %v26 = vpop.permute.xlu0 %25
    %27 = vset.pattern.permute.xlu0 0
    %28 = vperm.xlu0 %27, %v19
    %v29 = vpop.permute.xlu0 %28
    %30 = vset.pattern.permute.xlu0 0
    %31 = vperm.xlu0 %30, %v20
    %v32 = vpop.permute.xlu0 %31
    %vm33 = vcmp.eq.s32.totalorder %v26, %v23
    %vm34 = vcmp.eq.s32.totalorder %v29, %v23
    %vm35 = vcmp.eq.s32.totalorder %v32, %v23
    %v36 = vsel %vm33, 1, 0
    %v37 = vsel %vm34, 1, 0
    %v38 = vsel %vm35, 1, 0
    %v39 = vcvt.s32.f32 %v36
    %v40 = vcvt.s32.f32 %v37
    %v41 = vcvt.s32.f32 %v38
    %vm42 = vcmask 15360
    %v44 = vsel %vm42, %v39, 0
    %v47 = vsel %vm42, %v40, 0
    %v50 = vsel %vm42, %v41, 0
    %vm52 = vcmask 1041408
    %v54 = vsel %vm52, %v21, 0
    %56 = vmatprep.subr.mxu0 0.0
    %57 = vmatpush1.msra.mxu0 0.0
    %58 = vmatprep.subr.mxu0 0.0
    %59 = vmatpush1.msra.mxu0 0.0
    %60 = vmatprep.subr.mxu0 0.0
    %61 = vmatpush1.msra.mxu0 0.0
    %62 = vmatprep.subr.mxu0 0.0
    %63 = vmatpush1.msra.mxu0 0.0
    %64 = vmatprep.subr.mxu0 0.0
    %65 = vmatpush1.msra.mxu0 0.0
    %66 = vmatprep.subr.mxu0 0.0
    %67 = vmatpush1.msra.mxu0 0.0
    %68 = vmatprep.subr.mxu0 0.0
    %69 = vmatpush1.msra.mxu0 0.0
    %70 = vmatprep.subr.mxu0 0.0
    %71 = vmatpush1.msra.mxu0 0.0
    %72 = vmatprep.subr.mxu0 0.0
    %73 = vmatpush1.msra.mxu0 0.0
    %74 = vmatprep.subr.mxu0 0.0
    %75 = vmatpush1.msra.mxu0 0.0
    %76 = vmatprep.subr.mxu0 0.0
    %77 = vmatpush1.msra.mxu0 0.0
    %78 = vmatprep.subr.mxu0 0.0
    %79 = vmatpush1.msra.mxu0 0.0
    %80 = vmatprep.subr.mxu0 0.0
    %81 = vmatpush1.msra.mxu0 0.0
    %82 = vmatprep.subr.mxu0 0.0
    %83 = vmatpush1.msra.mxu0 0.0
    %84 = vmatprep.subr.mxu0 0.0
    %85 = vmatpush1.msra.mxu0 0.0
    %86 = vmatprep.subr.mxu0 0.0
    %87 = vmatpush1.msra.mxu0 %v54
    %88 = vmatprep.subr.mxu0 0.0
    %89 = vmatpush2.msra.mxu0 0.0
    %90 = vmatprep.subr.mxu0 0.0
    %91 = vmatpush2.msra.mxu0 0.0
    %92 = vmatprep.subr.mxu0 0.0
    %93 = vmatpush2.msra.mxu0 0.0
    %94 = vmatprep.subr.mxu0 0.0
    %95 = vmatpush2.msra.mxu0 0.0
    %96 = vmatprep.subr.mxu0 0.0
    %97 = vmatpush2.msra.mxu0 0.0
    %98 = vmatprep.subr.mxu0 0.0
    %99 = vmatpush2.msra.mxu0 0.0
    %100 = vmatprep.subr.mxu0 0.0
    %101 = vmatpush2.msra.mxu0 0.0
    %102 = vmatprep.subr.mxu0 0.0
    %103 = vmatpush2.msra.mxu0 0.0
    %104 = vmatprep.subr.mxu0 0.0
    %105 = vmatpush2.msra.mxu0 0.0
    %106 = vmatprep.subr.mxu0 0.0
    %107 = vmatpush2.msra.mxu0 0.0
    %108 = vmatprep.subr.mxu0 0.0
    %109 = vmatpush2.msra.mxu0 0.0
    %110 = vmatprep.subr.mxu0 0.0
    %111 = vmatpush2.msra.mxu0 0.0
    %112 = vmatprep.subr.mxu0 0.0
    %113 = vmatpush2.msra.mxu0 0.0
    %114 = vmatprep.subr.mxu0 0.0
    %115 = vmatpush2.msra.mxu0 0.0
    %116 = vmatprep.subr.mxu0 0.0
    %117 = vmatpush2.msra.mxu0 0.0
    %118 = vmatprep.subr.mxu0 0.0
    %119 = vmatpush2.msra.mxu0 0.0
    %120 = vmatprep.mubr.f32.mxu0 0.0
    %121 = vmatmul.mubr.f32.gmra.mxu0 %v44
    %v122 = vpop.f32.mrf.mxu0
    %v123 = vadd.f32 0.0, %v122
    %v124 = vpop.f32.mrf.mxu0
    %125 = vmatprep.mubr.f32.mxu0 0.0
    %126 = vmatmul.mubr.f32.gmra.mxu0 %v47
    %v127 = vpop.f32.mrf.mxu0
    %v128 = vadd.f32 0.0, %v127
    %v129 = vpop.f32.mrf.mxu0
    %130 = vmatprep.mubr.f32.mxu0 0.0
    %131 = vmatmul.mubr.f32.gmra.mxu0 %v50
    %v132 = vpop.f32.mrf.mxu0
    %v133 = vadd.f32 0.0, %v132
    %v134 = vpop.f32.mrf.mxu0
    %135 = vdwg.mxu0
    %v136 = vsub.f32 %v15, %v123
    %v137 = vsub.f32 %v16, %v128
    %v138 = vsub.f32 %v17, %v133
    %v139 = vmul.f32 %v136, %v136
    %v140 = vmul.f32 %v137, %v137
    %v141 = vmul.f32 %v138, %v138
    %142 = vadd.xlane.f32.xlu0 %v139
    %v143 = vpop.xlane.xlu0 %142
    %144 = vadd.xlane.f32.xlu0 %v140
    %v145 = vpop.xlane.xlu0 %144
    %146 = vadd.xlane.f32.xlu0 %v141
    %v147 = vpop.xlane.xlu0 %146
    %v148 = vmax.f32 %v143, 1e-12
    %v149 = vmax.f32 %v145, 1e-12
    %v150 = vmax.f32 %v147, 1e-12
    %v151 = vmin.f32 %v148, 1e+12
    %v152 = vmin.f32 %v149, 1e+12
    %v153 = vmin.f32 %v150, 1e+12
    %v154 = vlaneseq
    %v155 = vshrl.u32 %v154, 7
    %v156 = vadd.s32 %v155, 8
    %v157 = vadd.s32 %v155, 16
    %s158 = smul.u32 0, 24
    %v159 = vstv %s158
    %v160 = vadd.s32 %v155, %v159
    %v161 = vadd.s32 %v156, %v159
    %v162 = vadd.s32 %v157, %v159
    %vm163 = vcmp.lt.s32.totalorder %v160, 20
    %vm164 = vcmp.lt.s32.totalorder %v161, 20
    %vm165 = vcmp.lt.s32.totalorder %v162, 20
    %v166 = vsel %vm163, 1, 0
    %v167 = vsel %vm164, 1, 0
    %v168 = vsel %vm165, 1, 0
    %v169 = vcvt.s32.f32 %v166
    %v170 = vcvt.s32.f32 %v167
    %v171 = vcvt.s32.f32 %v168
    %v172 = vmul.f32 %v151, %v169
    %v173 = vmul.f32 %v152, %v170
    %v174 = vmul.f32 %v153, %v171
    %vm175 = vcmask 7168
    %v176 = vsel %vm175, %v172, 0.0
    %v177 = vsel %vm175, %v173, 0.0
    %v178 = vadd.f32 %v176, %v177
    %v179 = vsel %vm175, %v174, 0.0
    %v180 = vadd.f32 %v178, %v179
    %181 = vadd.xlane.f32.xlu0 %v180
    %v182 = vpop.xlane.xlu0 %181
    %v183 = vrot.slane %v182, 4
    %v184 = vadd.f32 %v182, %v183
    %v185 = vrot.slane %v184, 2
    %v186 = vadd.f32 %v184, %v185
    %v187 = vrot.slane %v186, 1
    %v188 = vadd.f32 %v186, %v187
    %s189 = vtos %v188
    %v190 = vstv %s189
    %191 = vst [vmem:[#allocation2] sm:$0xff] %v190
    // Predicated region
    $region14: #{tpu_custom_call.1} parent=1 // pred_check
      _
    $region15: #{tpu_custom_call.1} parent=1 // pred_check_branch
      %193 = sbr.rel (0) target = $region17
    $region16: #{tpu_custom_call.1} parent=1 // pred_region
      %s195 = ssub.s32 128, 128
      %196 = vsyncadd [#allocation3], %s195
      %s198 = sshll.u32 [#allocation2], 4
      %s199 = int_to_ptr.vmem [resolvable:$true] %s198
      %201 = dma.vmem_to_hbm [thread:$0]  %s199, 128, %s3, [#allocation3]
    $region17: #{tpu_custom_call.1} parent=1 // pred_fallthru
      _
    // Predicated region
    $region18: #{tpu_custom_call.1} parent=1 // pred_check
      _
    $region19: #{tpu_custom_call.1} parent=1 // pred_check_branch
      %203 = sbr.rel (0) target = $region21
    $region20: #{tpu_custom_call.1} parent=1 // pred_region
      %204 = dma.done [#allocation3], 128
    $region21: #{tpu_custom_call.1} parent=1 // pred_fallthru
      _
    %205 = vsyncpa [#allocation3], 1

</llo_original>
